<compile_context>
chip_gen: v7x
topology: tpu7x:2x2x1
jax: 0.10.0
libtpu: 0.0.40
codegen_flags: <defaults>
</compile_context>

<pallas_src>
import functools

import jax
import jax.numpy as jnp
from jax.experimental import pallas as pl
from jax.experimental.pallas import tpu as pltpu


def _bb_loss_kernel(logits_t_ref, labels_ref, biases_ref, logp_t_ref,
                    out_ref, acc_ref, *, n_total, rem):
    i = pl.program_id(0)
    last = pl.num_programs(0) - 1

    @pl.when(i == 0)
    def _init():
        acc_ref[...] = jnp.zeros_like(acc_ref)

    z = logits_t_ref[...].astype(jnp.float32)        # (C, TILE_N)
    labels = labels_ref[...]                         # (1, TILE_N) int32
    biases = biases_ref[...]                         # (1, TILE_N) int32
    logp_t = logp_t_ref[...]                         # (C, NB) f32 = log(CM+eps).T

    c, tile_n = z.shape
    nb = logp_t.shape[1]

    # Gather log(prior) per example via a one-hot matmul on the MXU:
    #   onehot[b, n] = (b == biases[n]);  (C, NB) @ (NB, TILE_N) -> (C, TILE_N)
    b_iota = jax.lax.broadcasted_iota(jnp.int32, (nb, tile_n), 0)
    onehot_b = (b_iota == biases).astype(jnp.float32)
    log_prior = jnp.dot(logp_t, onehot_b, preferred_element_type=jnp.float32)

    z = z + log_prior

    # Cross-entropy per column (class axis = sublane axis 0), no full softmax.
    m = jnp.max(z, axis=0, keepdims=True)            # (1, TILE_N)
    sum_e = jnp.sum(jnp.exp(z - m), axis=0, keepdims=True)
    lse = m + jnp.log(sum_e)                         # (1, TILE_N)

    c_iota = jax.lax.broadcasted_iota(jnp.int32, (c, tile_n), 0)
    z_y = jnp.sum(jnp.where(c_iota == labels, z, 0.0), axis=0, keepdims=True)

    loss_row = lse - z_y                             # (1, TILE_N)

    if rem == 0:
        # N is an exact multiple of the tile: unmasked hot path everywhere.
        acc_ref[...] += loss_row
    else:
        # Only the final partial tile pays for the masking (padded columns may
        # hold garbage -> inf/NaN in loss_row, but jnp.where is a select, so
        # the masked lanes never contaminate the accumulator).
        @pl.when(i != last)
        def _acc_full():
            acc_ref[...] += loss_row

        @pl.when(i == last)
        def _acc_masked():
            col = jax.lax.broadcasted_iota(jnp.int32, (1, tile_n), 1)
            acc_ref[...] += jnp.where(col < rem, loss_row, 0.0)

    @pl.when(i == last)
    def _finalize():
        out_ref[0, 0] = jnp.sum(acc_ref[...]) * jnp.float32(1.0 / n_total)


def bb_loss(logits, labels, biases, confusion_matrix, *,
            min_prob=1e-9, tile_n=32768, logits_are_transposed=False,
            vmem_limit_bytes=48 * 1024 * 1024):
    """Pallas implementation of BBLoss.forward (mean bias-adjusted CE).

    Pass logits as (C, N) with logits_are_transposed=True to avoid an extra
    full-HBM transpose pass in front of the (memory-bound) kernel.
    """
    if logits_are_transposed:
        c, n = logits.shape
        logits_t = logits                                      # (C, N), no extra pass
        transpose_bytes = 0
    else:
        n, c = logits.shape
        # TODO(synk): producer-side fix preferred — XLA materializes this
        # transpose as a full HBM read+write before the kernel runs.
        logits_t = logits.T                                    # (C, N)
        transpose_bytes = 2 * logits.size * logits.dtype.itemsize

    nb = confusion_matrix.shape[0]

    # Tile sizing: full batch if it fits in one tile, otherwise a multiple of
    # 128 (lane width) to satisfy the (8,128) block divisibility rule.
    if n <= tile_n:
        tile_n = n
    else:
        tile_n = max(128, (int(tile_n) // 128) * 128)
    rem = n % tile_n                                           # 0 => no masking code

    labels_row = labels.reshape(1, n).astype(jnp.int32)        # lane-dense int32
    biases_row = biases.reshape(1, n).astype(jnp.int32)
    logp_t = jnp.log(confusion_matrix.astype(jnp.float32) + min_prob).T  # (C, NB)

    grid = (pl.cdiv(n, tile_n),)
    kernel = functools.partial(_bb_loss_kernel, n_total=n, rem=rem)

    bytes_in = (logits.size * logits.dtype.itemsize + 2 * n * 4 + c * nb * 4
                + transpose_bytes)
    out = pl.pallas_call(
        kernel,
        out_shape=jax.ShapeDtypeStruct((1, 1), jnp.float32),
        grid=grid,
        in_specs=[
            pl.BlockSpec((c, tile_n), lambda i: (0, i)),       # logits.T tile
            pl.BlockSpec((1, tile_n), lambda i: (0, i)),       # labels tile
            pl.BlockSpec((1, tile_n), lambda i: (0, i)),       # biases tile
            pl.BlockSpec((c, nb), lambda i: (0, 0)),           # log-prior table (resident)
        ],
        out_specs=pl.BlockSpec((1, 1), lambda i: (0, 0),
                               memory_space=pltpu.MemorySpace.SMEM),
        scratch_shapes=[pltpu.VMEM((1, tile_n), jnp.float32)],  # per-lane loss acc
        compiler_params=pltpu.CompilerParams(
            dimension_semantics=("arbitrary",),
            vmem_limit_bytes=vmem_limit_bytes),
        cost_estimate=pl.CostEstimate(
            flops=2 * n * c * (nb + 4),
            transcendentals=n * (c + 1),
            bytes_accessed=bytes_in + 4),
    )(logits_t, labels_row, biases_row, logp_t)
    return out[0, 0]


def _bb_loss_ref(logits, labels, biases, confusion_matrix, *, min_prob=1e-9):
    prior = confusion_matrix[biases]
    z = logits.astype(jnp.float32) + jnp.log(prior.astype(jnp.float32) + min_prob)
    logp = jax.nn.log_softmax(z, axis=1)
    nll = -jnp.take_along_axis(logp, labels[:, None].astype(jnp.int32), axis=1)[:, 0]
    return jnp.mean(nll)


if __name__ == "__main__":
    num_classes = 10
    num_bias = 10

    key = jax.random.PRNGKey(0)
    k_cm, k_rest = jax.random.split(key)
    confusion_matrix = jax.nn.softmax(
        jax.random.normal(k_cm, (num_bias, num_classes), dtype=jnp.float32), axis=1)

    # Two cases: single full-batch tile, and a multi-tile grid with a masked
    # partial last tile (exercises the accumulator + gated padding path).
    for batch, tile in ((8, 512), (200, 128)):
        kl, kla, kb = jax.random.split(jax.random.fold_in(k_rest, batch), 3)
        logits = jax.random.normal(kl, (batch, num_classes), dtype=jnp.float32)
        labels = jax.random.randint(kla, (batch,), 0, num_classes, dtype=jnp.int32)
        biases = jax.random.randint(kb, (batch,), 0, num_bias, dtype=jnp.int32)

        ref = _bb_loss_ref(logits, labels, biases, confusion_matrix)

        # Default (N, C) path (wrapper transposes).
        out = bb_loss(logits, labels, biases, confusion_matrix, tile_n=tile)
        out = jax.block_until_ready(out)
        assert jnp.allclose(out, ref, atol=1e-5, rtol=1e-5), (batch, out, ref)

        # Preferred producer-side layout: logits already (C, N), no hidden
        # transpose pass in front of the kernel.
        out_cn = bb_loss(jnp.asarray(logits.T), labels, biases, confusion_matrix,
                         tile_n=tile, logits_are_transposed=True)
        out_cn = jax.block_until_ready(out_cn)
        assert jnp.allclose(out_cn, ref, atol=1e-5, rtol=1e-5), (batch, out_cn, ref)

    print("KERNEL_OK")
</pallas_src>

<mosaic_0001>
module attributes {stable_mosaic.version = 11 : i64} {
  func.func @_bb_loss_kernel(%arg0: i32, %arg1: memref<10x8xf32, #tpu.memory_space<vmem>>, %arg2: memref<1x8xi32, #tpu.memory_space<vmem>>, %arg3: memref<1x8xi32, #tpu.memory_space<vmem>>, %arg4: memref<10x10xf32, #tpu.memory_space<vmem>>, %arg5: memref<1x1xf32, #tpu.memory_space<smem>>, %arg6: memref<1x8xf32, #tpu.memory_space<vmem>>) attributes {dimension_semantics = [#tpu.dimension_semantics<arbitrary>], iteration_bounds = array<i64: 1>, scalar_prefetch = 0 : i64, scratch_operands = 1 : i64, tpu.core_type = #tpu.core_type<tc>, window_params = [{transform_indices = @transform_0, window_bounds = array<i64: 10, 8>}, {transform_indices = @transform_1, window_bounds = array<i64: 1, 8>}, {transform_indices = @transform_2, window_bounds = array<i64: 1, 8>}, {pipeline_mode = #tpu.pipeline_mode<synchronous>, transform_indices = @transform_3, window_bounds = array<i64: 10, 10>}, {transform_indices = @transform_4, window_bounds = array<i64: 1, 1>}]} {
    %c0_i32 = arith.constant 0 : i32
    %0 = arith.cmpi eq, %arg0, %c0_i32 : i32
    %1 = arith.extui %0 : i1 to i32
    %c0_i32_0 = arith.constant 0 : i32
    %2 = arith.cmpi ne, %1, %c0_i32_0 : i32
    scf.if %2 {
      %cst_18 = arith.constant 0.000000e+00 : f32
      %37 = vector.broadcast %cst_18 : f32 to vector<1x8xf32>
      %c0_19 = arith.constant 0 : index
      %c0_20 = arith.constant 0 : index
      %38 = vector.load %arg6[%c0_19, %c0_20] : memref<1x8xf32, #tpu.memory_space<vmem>>, vector<1x8xf32>
      tpu.vector_store %arg6[%c0_19, %c0_20], %37 {strides = array<i32>} : memref<1x8xf32, #tpu.memory_space<vmem>>, vector<1x8xf32>,
    } else {
    }
    %c0 = arith.constant 0 : index
    %c0_1 = arith.constant 0 : index
    %3 = vector.load %arg1[%c0, %c0_1] : memref<10x8xf32, #tpu.memory_space<vmem>>, vector<10x8xf32>
    %c0_2 = arith.constant 0 : index
    %c0_3 = arith.constant 0 : index
    %4 = vector.load %arg2[%c0_2, %c0_3] : memref<1x8xi32, #tpu.memory_space<vmem>>, vector<1x8xi32>
    %c0_4 = arith.constant 0 : index
    %c0_5 = arith.constant 0 : index
    %5 = vector.load %arg3[%c0_4, %c0_5] : memref<1x8xi32, #tpu.memory_space<vmem>>, vector<1x8xi32>
    %c0_6 = arith.constant 0 : index
    %c0_7 = arith.constant 0 : index
    %6 = vector.load %arg4[%c0_6, %c0_7] : memref<10x10xf32, #tpu.memory_space<vmem>>, vector<10x10xf32>
    %7 = tpu.iota {dimensions = array<i32: 0>} : vector<10x8xi32>
    %8 = vector.broadcast %5 : vector<1x8xi32> to vector<10x8xi32>
    %9 = arith.cmpi eq, %7, %8 : vector<10x8xi32>
    %10 = arith.extui %9 : vector<10x8xi1> to vector<10x8xi32>
    %11 = arith.sitofp %10 : vector<10x8xi32> to vector<10x8xf32>
    %cst = arith.constant dense<0.000000e+00> : vector<10x8xf32>
    %12 = tpu.matmul %6, %11, %cst {dimension_numbers = #tpu.dot_dimension_numbers<[1], [0], [0], [1], [0, 0, 1, 1], [], []>} : vector<10x10xf32>, vector<10x8xf32>, vector<10x8xf32> -> vector<10x8xf32>
    %13 = arith.addf %3, %12 : vector<10x8xf32>
    %cst_8 = arith.constant dense<0xFF800000> : vector<8xf32>
    %14 = vector.multi_reduction <maximumf>, %13, %cst_8 [0] : vector<10x8xf32> to vector<8xf32>
    %15 = vector.shape_cast %14 : vector<8xf32> to vector<1x8xf32>
    %16 = vector.broadcast %15 : vector<1x8xf32> to vector<10x8xf32>
    %17 = arith.subf %13, %16 : vector<10x8xf32>
    %18 = math.exp %17 : vector<10x8xf32>
    %cst_9 = arith.constant dense<0.000000e+00> : vector<8xf32>
    %19 = vector.multi_reduction <add>, %18, %cst_9 [0] : vector<10x8xf32> to vector<8xf32>
    %20 = vector.shape_cast %19 : vector<8xf32> to vector<1x8xf32>
    %21 = math.log %20 : vector<1x8xf32>
    %22 = arith.addf %15, %21 : vector<1x8xf32>
    %23 = tpu.iota {dimensions = array<i32: 0>} : vector<10x8xi32>
    %24 = vector.broadcast %4 : vector<1x8xi32> to vector<10x8xi32>
    %25 = arith.cmpi eq, %23, %24 : vector<10x8xi32>
    %cst_10 = arith.constant 0.000000e+00 : f32
    %26 = vector.broadcast %cst_10 : f32 to vector<10x8xf32>
    %27 = arith.select %25, %13, %26 : vector<10x8xi1>, vector<10x8xf32>
    %cst_11 = arith.constant dense<0.000000e+00> : vector<8xf32>
    %28 = vector.multi_reduction <add>, %27, %cst_11 [0] : vector<10x8xf32> to vector<8xf32>
    %29 = vector.shape_cast %28 : vector<8xf32> to vector<1x8xf32>
    %30 = arith.subf %22, %29 : vector<1x8xf32>
    %c0_12 = arith.constant 0 : index
    %c0_13 = arith.constant 0 : index
    %31 = vector.load %arg6[%c0_12, %c0_13] : memref<1x8xf32, #tpu.memory_space<vmem>>, vector<1x8xf32>
    %32 = arith.addf %31, %30 : vector<1x8xf32>
    %c0_14 = arith.constant 0 : index
    %c0_15 = arith.constant 0 : index
    %33 = vector.load %arg6[%c0_14, %c0_15] : memref<1x8xf32, #tpu.memory_space<vmem>>, vector<1x8xf32>
    tpu.vector_store %arg6[%c0_14, %c0_15], %32 {strides = array<i32>} : memref<1x8xf32, #tpu.memory_space<vmem>>, vector<1x8xf32>,
    %c0_i32_16 = arith.constant 0 : i32
    %34 = arith.cmpi eq, %arg0, %c0_i32_16 : i32
    %35 = arith.extui %34 : i1 to i32
    %c0_i32_17 = arith.constant 0 : i32
    %36 = arith.cmpi ne, %35, %c0_i32_17 : i32
    scf.if %36 {
      %c0_18 = arith.constant 0 : index
      %c0_19 = arith.constant 0 : index
      %37 = vector.load %arg6[%c0_18, %c0_19] : memref<1x8xf32, #tpu.memory_space<vmem>>, vector<1x8xf32>
      %38 = vector.shape_cast %37 : vector<1x8xf32> to vector<1x1x8xf32>
      %cst_20 = arith.constant dense<0.000000e+00> : vector<1xf32>
      %39 = vector.multi_reduction <add>, %38, %cst_20 [1, 2] : vector<1x1x8xf32> to vector<1xf32>
      %40 = vector.shape_cast %39 : vector<1xf32> to vector<1x1x1xf32>
      %41 = vector.extract %40[0, 0, 0] : f32 from vector<1x1x1xf32>
      %cst_21 = arith.constant 1.250000e-01 : f32
      %42 = arith.mulf %41, %cst_21 : f32
      %c0_22 = arith.constant 0 : index
      %c0_23 = arith.constant 0 : index
      %43 = memref.load %arg5[%c0_22, %c0_23] : memref<1x1xf32, #tpu.memory_space<smem>>
      memref.store %42, %arg5[%c0_22, %c0_23] : memref<1x1xf32, #tpu.memory_space<smem>>
    } else {
    }
    return
  }
  func.func @transform_0(%arg0: i32) -> (i32, i32) {
    %c0_i32 = arith.constant 0 : i32
    %c0_i32_0 = arith.constant 0 : i32
    return %c0_i32, %arg0 : i32, i32
  }
  func.func @transform_1(%arg0: i32) -> (i32, i32) {
    %c0_i32 = arith.constant 0 : i32
    %c0_i32_0 = arith.constant 0 : i32
    return %c0_i32, %arg0 : i32, i32
  }
  func.func @transform_2(%arg0: i32) -> (i32, i32) {
    %c0_i32 = arith.constant 0 : i32
    %c0_i32_0 = arith.constant 0 : i32
    return %c0_i32, %arg0 : i32, i32
  }
  func.func @transform_3(%arg0: i32) -> (i32, i32) {
    %c0_i32 = arith.constant 0 : i32
    %c0_i32_0 = arith.constant 0 : i32
    %c0_i32_1 = arith.constant 0 : i32
    return %c0_i32, %c0_i32_0 : i32, i32
  }
  func.func @transform_4(%arg0: i32) -> (i32, i32) {
    %c0_i32 = arith.constant 0 : i32
    %c0_i32_0 = arith.constant 0 : i32
    %c0_i32_1 = arith.constant 0 : i32
    return %c0_i32, %c0_i32_0 : i32, i32
  }
}

</mosaic_0001>

<llo_original>
// kernel: tpu_custom_call.1
$region0: #{tpu_custom_call.1}
  #allocation0 [shape = 'u32[]', space=smem, size = 0x4, offset = 0x4, fixed_abs, tag = 'smem constant byte address 0x4 - core index']
  #allocation1 [shape = 'u32[144,128]{1,0:T(1,128)}', space=vmem, size = 0x12000, scoped, tag = 'internal scratch']
  #allocation2 [shape = 'f32[1,8]{1,0:T(1,128)}', space=vmem, size = 0x200, scoped, tag = 'scratch operand']
  %s0 = inlined_call_operand.vmem [shape: f32[10,8], index: 0, kind: input, shape index: {}]
  %s1 = inlined_call_operand.vmem [shape: s32[1,8], index: 1, kind: input, shape index: {}]
  %s2 = inlined_call_operand.vmem [shape: s32[1,8], index: 2, kind: input, shape index: {}]
  %s3 = inlined_call_operand.vmem [shape: f32[10,10], index: 3, kind: input, shape index: {}]
  %s4 = inlined_call_operand.hbm [shape: f32[1,1], index: 4, kind: output, shape index: {}]
  %s5 = sld [smem:[#allocation0]]
  $region34: #{tpu_custom_call.1} parent=0
    _
  %s7 = ssub.s32 1, %s5
  %s8 = scalar_select 0, %s7, %s5
  $region1: #{tpu_custom_call.1} parent=0
    #allocation3 [shape = 'u8[512]{0}', space=smem, size = 0x200, scoped, tag = 'output window, operand 0, single buffered']
    #allocation4 [shape = 's32[1]{0}', space=sflag, size = 0x4, scoped, tag = 'scoped memory for tpu_custom_call.1']
    %9 = vsyncpa [#allocation4], 0
    // Predicated region
    $region2: #{tpu_custom_call.1} parent=1 // pred_check
      _
    $region3: #{tpu_custom_call.1} parent=1 // pred_check_branch
      %11 = sbr.rel (0) target = $region5
    $region4: #{tpu_custom_call.1} parent=1 // pred_region
      _
    $region5: #{tpu_custom_call.1} parent=1 // pred_fallthru
      _
    // Predicated region
    $region6: #{tpu_custom_call.1} parent=1 // pred_check
      _
    $region7: #{tpu_custom_call.1} parent=1 // pred_check_branch
      %13 = sbr.rel (0) target = $region9
    $region8: #{tpu_custom_call.1} parent=1 // pred_region
      _
    $region9: #{tpu_custom_call.1} parent=1 // pred_fallthru
      _
    // Predicated region
    $region10: #{tpu_custom_call.1} parent=1 // pred_check
      _
    $region11: #{tpu_custom_call.1} parent=1 // pred_check_branch
      %15 = sbr.rel (0) target = $region13
    $region12: #{tpu_custom_call.1} parent=1 // pred_region
      _
    $region13: #{tpu_custom_call.1} parent=1 // pred_fallthru
      _
    // Predicated region
    $region14: #{tpu_custom_call.1} parent=1 // pred_check
      _
    $region15: #{tpu_custom_call.1} parent=1 // pred_check_branch
      %17 = sbr.rel (0) target = $region17
    $region16: #{tpu_custom_call.1} parent=1 // pred_region
      _
    $region17: #{tpu_custom_call.1} parent=1 // pred_fallthru
      _
    %p18 = scmp.eq.s32.totalorder 0, 0
    // Predicated region
    $region18: #{tpu_custom_call.1} parent=1 // pred_check
      %p19 = pneg %p18
    $region19: #{tpu_custom_call.1} parent=1 // pred_check_branch
      %21 = sbr.rel (%p19) target = $region21
    $region20: #{tpu_custom_call.1} parent=1 // pred_region
      %vm22 = vcmask 57344
      %23 = vst.msk [vmem:[#allocation2] sm:$0x1] %vm22, 0.0
    $region21: #{tpu_custom_call.1} parent=1 // pred_fallthru
      _
    %v24 = vld [vmem:[%s0] sm:$0xff]
    %v25 = vld [vmem:[%s0 + $0x8] sm:$0x3]
    %v26 = vld [vmem:[%s1] sm:$0x1]
    %v27 = vld [vmem:[%s2] sm:$0x1]
    %v28 = vld [vmem:[%s3] sm:$0xff]
    %v29 = vld [vmem:[%s3 + $0x8] sm:$0x3]
    %v30 = vlaneseq
    %v31 = vshrl.u32 %v30, 7
    %v32 = vadd.s32 %v31, 8
    %v33 = vlaneseq
    %v34 = vshrl.u32 %v33, 7
    %v35 = vsub.s32 0, %v34
    %v36 = vrot.slane %v27, %v35
    %vm37 = vcmp.eq.s32.totalorder %v31, %v36
    %vm38 = vcmp.eq.s32.totalorder %v32, %v36
    %v39 = vsel %vm37, 1, 0
    %v40 = vsel %vm38, 1, 0
    %v41 = vcvt.s32.f32 %v39
    %v42 = vcvt.s32.f32 %v40
    %vm43 = vcmask 80896
    %v45 = vsel %vm43, %v28, 0
    %v48 = vsel %vm43, %v29, 0
    %vm50 = vcmask 1041408
    %v52 = vsel %vm50, %v42, 0
    %54 = vmatprep.subr.mxu0 0.0
    %55 = vmatpush1.msra.mxu0 %v41
    %56 = vmatprep.subr.mxu0 0.0
    %57 = vmatpush1.msra.mxu0 %v52
    %58 = vmatprep.subr.mxu0 0.0
    %59 = vmatpush1.msra.mxu0 0.0
    %60 = vmatprep.subr.mxu0 0.0
    %61 = vmatpush1.msra.mxu0 0.0
    %62 = vmatprep.subr.mxu0 0.0
    %63 = vmatpush1.msra.mxu0 0.0
    %64 = vmatprep.subr.mxu0 0.0
    %65 = vmatpush1.msra.mxu0 0.0
    %66 = vmatprep.subr.mxu0 0.0
    %67 = vmatpush1.msra.mxu0 0.0
    %68 = vmatprep.subr.mxu0 0.0
    %69 = vmatpush1.msra.mxu0 0.0
    %70 = vmatprep.subr.mxu0 0.0
    %71 = vmatpush1.msra.mxu0 0.0
    %72 = vmatprep.subr.mxu0 0.0
    %73 = vmatpush1.msra.mxu0 0.0
    %74 = vmatprep.subr.mxu0 0.0
    %75 = vmatpush1.msra.mxu0 0.0
    %76 = vmatprep.subr.mxu0 0.0
    %77 = vmatpush1.msra.mxu0 0.0
    %78 = vmatprep.subr.mxu0 0.0
    %79 = vmatpush1.msra.mxu0 0.0
    %80 = vmatprep.subr.mxu0 0.0
    %81 = vmatpush1.msra.mxu0 0.0
    %82 = vmatprep.subr.mxu0 0.0
    %83 = vmatpush1.msra.mxu0 0.0
    %84 = vmatprep.subr.mxu0 0.0
    %85 = vmatpush1.msra.mxu0 0.0
    %86 = vmatprep.subr.mxu0 0.0
    %87 = vmatpush1.msra.mxu0 0.0
    %88 = vmatprep.subr.mxu0 0.0
    %89 = vmatpush1.msra.mxu0 0.0
    %90 = vmatprep.subr.mxu0 0.0
    %91 = vmatpush1.msra.mxu0 0.0
    %92 = vmatprep.subr.mxu0 0.0
    %93 = vmatpush1.msra.mxu0 0.0
    %94 = vmatprep.subr.mxu0 0.0
    %95 = vmatpush1.msra.mxu0 0.0
    %96 = vmatprep.subr.mxu0 0.0
    %97 = vmatpush1.msra.mxu0 0.0
    %98 = vmatprep.subr.mxu0 0.0
    %99 = vmatpush1.msra.mxu0 0.0
    %100 = vmatprep.subr.mxu0 0.0
    %101 = vmatpush1.msra.mxu0 0.0
    %102 = vmatprep.subr.mxu0 0.0
    %103 = vmatpush1.msra.mxu0 0.0
    %104 = vmatprep.subr.mxu0 0.0
    %105 = vmatpush1.msra.mxu0 0.0
    %106 = vmatprep.subr.mxu0 0.0
    %107 = vmatpush1.msra.mxu0 0.0
    %108 = vmatprep.subr.mxu0 0.0
    %109 = vmatpush1.msra.mxu0 0.0
    %110 = vmatprep.subr.mxu0 0.0
    %111 = vmatpush1.msra.mxu0 0.0
    %112 = vmatprep.subr.mxu0 0.0
    %113 = vmatpush1.msra.mxu0 0.0
    %114 = vmatprep.subr.mxu0 0.0
    %115 = vmatpush1.msra.mxu0 0.0
    %116 = vmatprep.subr.mxu0 0.0
    %117 = vmatpush1.msra.mxu0 0.0
    %118 = vmatprep.mubr.f32.mxu0 0.0
    %119 = vmatmul.mubr.f32.gmra.mrb[0].mxu0 %v45
    %v120 = vpop.f32.mrb[0].mxu0
    %v121 = vadd.f32 0.0, %v120
    %v122 = vpop.f32.mrb[0].mxu0
    %123 = vmatprep.mubr.f32.mxu0 0.0
    %124 = vmatmul.mubr.f32.gmra.mrb[0].mxu0 %v48
    %v125 = vpop.f32.mrb[0].mxu0
    %v126 = vadd.f32 0.0, %v125
    %v127 = vpop.f32.mrb[0].mxu0
    %128 = vdwg.mxu0
    %v129 = vadd.f32 %v24, %v121
    %v130 = vadd.f32 %v25, %v126
    %vm131 = vcmask 64512
    %v132 = vsel %vm131, %v129, -inf
    %vm133 = vcmask 58368
    %v134 = vsel %vm133, %v130, -inf
    %v135 = vmax.f32 %v132, %v134
    %v136 = vrot.slane %v135, 4
    %v137 = vmax.f32 %v135, %v136
    %v138 = vrot.slane %v137, 2
    %v139 = vmax.f32 %v137, %v138
    %v140 = vrot.slane %v139, 1
    %v141 = vmax.f32 %v139, %v140
    %v142 = vsub.f32 %v129, %v141
    %v143 = vsub.f32 %v130, %v141
    %v144 = vmul.f32 %v142, 1.442695
    %v145 = vpow.pop %v144
    %v146 = vmul.f32 %v143, 1.442695
    %v147 = vpow.pop %v146
    %v148 = vsel %vm131, %v145, 0.0
    %v149 = vsel %vm133, %v147, 0.0
    %v150 = vadd.f32 %v148, %v149
    %v151 = vrot.slane %v150, 4
    %v152 = vadd.f32 %v150, %v151
    %v153 = vrot.slane %v152, 2
    %v154 = vadd.f32 %v152, %v153
    %v155 = vrot.slane %v154, 1
    %v156 = vadd.f32 %v154, %v155
    %v157 = vlog2.pop %v156
    %v158 = vmul.f32 %v157, 0.6931472
    %v159 = vadd.f32 %v141, %v158
    %v160 = vlaneseq
    %v161 = vshrl.u32 %v160, 7
    %v162 = vsub.s32 0, %v161
    %v163 = vrot.slane %v26, %v162
    %vm164 = vcmp.eq.s32.totalorder %v31, %v163
    %vm165 = vcmp.eq.s32.totalorder %v32, %v163
    %v166 = vsel %vm164, %v129, 0.0
    %v167 = vsel %vm165, %v130, 0.0
    %v168 = vsel %vm131, %v166, 0.0
    %v169 = vsel %vm133, %v167, 0.0
    %v170 = vadd.f32 %v168, %v169
    %v171 = vrot.slane %v170, 4
    %v172 = vadd.f32 %v170, %v171
    %v173 = vrot.slane %v172, 2
    %v174 = vadd.f32 %v172, %v173
    %v175 = vrot.slane %v174, 1
    %v176 = vadd.f32 %v174, %v175
    %v177 = vsub.f32 %v159, %v176
    %v178 = vld [vmem:[#allocation2] sm:$0x1]
    %v179 = vadd.f32 %v178, %v177
    %vm180 = vcmask 57344
    %181 = vst.msk [vmem:[#allocation2] sm:$0x1] %vm180, %v179
    // Predicated region
    $region22: #{tpu_custom_call.1} parent=1 // pred_check
      %p182 = pneg %p18
    $region23: #{tpu_custom_call.1} parent=1 // pred_check_branch
      %184 = sbr.rel (%p182) target = $region25
    $region24: #{tpu_custom_call.1} parent=1 // pred_region
      %v185 = vld [vmem:[#allocation2] sm:$0x1]
      %v186 = vsel %vm180, %v185, 0.0
      %187 = vadd.xlane.f32.xlu0 %v186
      %v188 = vpop.xlane.xlu0 %187
      %v189 = vrot.slane %v188, 4
      %v190 = vadd.f32 %v188, %v189
      %v191 = vrot.slane %v190, 2
      %v192 = vadd.f32 %v190, %v191
      %v193 = vrot.slane %v192, 1
      %v194 = vadd.f32 %v192, %v193
      %s195 = vtos %v194
      %s196 = smul.f32 %s195, 0.125
      %s197 = scalar_lea.smem [#allocation3], 0
      %198 = sst [smem:[%s197]] %s196
    $region25: #{tpu_custom_call.1} parent=1 // pred_fallthru
      _
    // Predicated region
    $region26: #{tpu_custom_call.1} parent=1 // pred_check
      _
    $region27: #{tpu_custom_call.1} parent=1 // pred_check_branch
      %200 = sbr.rel (0) target = $region29
    $region28: #{tpu_custom_call.1} parent=1 // pred_region
      %s202 = ssub.s32 16, 16
      %203 = vsyncadd [#allocation4], %s202
      %206 = dma.smem_to_hbm [#allocation3], 16, %s4, [#allocation4]
    $region29: #{tpu_custom_call.1} parent=1 // pred_fallthru
      _
    // Predicated region
    $region30: #{tpu_custom_call.1} parent=1 // pred_check
      _
    $region31: #{tpu_custom_call.1} parent=1 // pred_check_branch
      %208 = sbr.rel (0) target = $region33
    $region32: #{tpu_custom_call.1} parent=1 // pred_region
      %209 = dma.done [#allocation4], 16
    $region33: #{tpu_custom_call.1} parent=1 // pred_fallthru
      _
    %210 = sfence
    %211 = vsyncpa [#allocation4], 1

</llo_original>
